<compile_context>
chip_gen: v7x
topology: tpu7x:2x2x1
jax: 0.10.0
libtpu: 0.0.40
codegen_flags: <defaults>
</compile_context>

<pallas_src>
import functools

import jax
import jax.numpy as jnp
from jax.experimental import pallas as pl
from jax.experimental.pallas import tpu as pltpu

LANE = 128          # lane width; use 256 on v6e/v7x if mlp_hidden_dim >= 256
MAX_TILE_B = 2048   # batch-tile cap (VMEM-friendly with huge headroom at these dims)


def dqn_kernel(x_ref, w1_ref, b1_ref, w2_ref, b2_ref, w3_ref, b3_ref, q_ref):
    # One batch tile: three fused MXU matmuls (bf16 in, f32 accumulate) with the
    # bias add + ReLU epilogue in f32 on the VPU.  The f32->bf16 cast of x is
    # done here (VPU op, hidden under the MXU/DMA slots) instead of in the wrapper.
    x = x_ref[...].astype(w1_ref.dtype)
    h1 = jnp.dot(x, w1_ref[...], preferred_element_type=jnp.float32) + b1_ref[...]
    h1 = jnp.maximum(h1, 0.0)
    h2 = jnp.dot(h1.astype(w2_ref.dtype), w2_ref[...],
                 preferred_element_type=jnp.float32) + b2_ref[...]
    h2 = jnp.maximum(h2, 0.0)
    q = jnp.dot(h2.astype(w3_ref.dtype), w3_ref[...],
                preferred_element_type=jnp.float32) + b3_ref[...]
    q_ref[...] = q.astype(q_ref.dtype)


def _round_up(n, m):
    return ((n + m - 1) // m) * m


def _pad2(a, rows, cols):
    return jnp.pad(a, ((0, rows - a.shape[0]), (0, cols - a.shape[1])))


def prepare_params(params, *, compute_dtype=jnp.bfloat16):
    """Pad the hidden dim to the lane width and cast MXU weights to bf16 ONCE
    (call at init / after each param update, not per forward)."""
    D, H = params["w1"].shape
    A = params["w3"].shape[1]
    H_p = _round_up(H, LANE)
    return {
        "w1": _pad2(params["w1"], D, H_p).astype(compute_dtype),   # [D, H_p]
        "b1": _pad2(params["b1"], 1, H_p).astype(jnp.float32),     # [1, H_p]
        "w2": _pad2(params["w2"], H_p, H_p).astype(compute_dtype), # [H_p, H_p]
        "b2": _pad2(params["b2"], 1, H_p).astype(jnp.float32),     # [1, H_p]
        "w3": _pad2(params["w3"], H_p, A).astype(compute_dtype),   # [H_p, A] (A unpadded)
        "b3": params["b3"].astype(jnp.float32),                    # [1, A]
    }


def _choose_tile_b(B):
    """Batch tile: whole batch for tiny B; otherwise ~B/2 (>=2 grid steps so the
    'parallel' axis can shard across v7x's two TensorCores), 16-row aligned
    (bf16 sublane packing), capped for VMEM friendliness."""
    if B <= 64:
        return B  # single full-array block (full-dim block shapes are always legal)
    return min(MAX_TILE_B, _round_up(pl.cdiv(B, 2), 16))


@functools.partial(jax.jit, static_argnames=("out_dtype",))
def dqn_forward(x, padded_params, *, out_dtype=jnp.float32):
    """x: [B, input_dim] f32 (unpadded); padded_params: output of prepare_params."""
    B, D = x.shape
    p = padded_params
    H_p = p["w1"].shape[1]
    A = p["w3"].shape[1]

    tile_b = _choose_tile_b(B)
    grid = (pl.cdiv(B, tile_b),)   # partial last block handled by Pallas masking

    return pl.pallas_call(
        dqn_kernel,
        out_shape=jax.ShapeDtypeStruct((B, A), out_dtype),
        grid_spec=pltpu.PrefetchScalarGridSpec(
            num_scalar_prefetch=0,
            grid=grid,
            in_specs=[
                pl.BlockSpec((tile_b, D), lambda i: (i, 0)),    # x: batch-tiled, unpadded f32
                pl.BlockSpec((D, H_p), lambda i: (0, 0)),       # W1: VMEM-resident
                pl.BlockSpec((1, H_p), lambda i: (0, 0)),       # b1: resident
                pl.BlockSpec((H_p, H_p), lambda i: (0, 0)),     # W2: resident
                pl.BlockSpec((1, H_p), lambda i: (0, 0)),       # b2: resident
                pl.BlockSpec((H_p, A), lambda i: (0, 0)),       # W3: resident (A unpadded)
                pl.BlockSpec((1, A), lambda i: (0, 0)),         # b3: resident
            ],
            out_specs=pl.BlockSpec((tile_b, A), lambda i: (i, 0)),  # q: batch-tiled, unpadded
        ),
        compiler_params=pltpu.CompilerParams(
            dimension_semantics=("parallel",)),  # v7x: shard batch grid across both TCs
    )(x, p["w1"], p["b1"], p["w2"], p["b2"], p["w3"], p["b3"])


def dqn_reference(x, params, *, compute_dtype=jnp.bfloat16):
    """Pure-JAX reference using the same bf16-in / f32-accumulate math."""
    cd = compute_dtype
    h1 = jnp.maximum(jnp.dot(x.astype(cd), params["w1"].astype(cd),
                             preferred_element_type=jnp.float32) + params["b1"], 0.0)
    h2 = jnp.maximum(jnp.dot(h1.astype(cd), params["w2"].astype(cd),
                             preferred_element_type=jnp.float32) + params["b2"], 0.0)
    q = jnp.dot(h2.astype(cd), params["w3"].astype(cd),
                preferred_element_type=jnp.float32) + params["b3"]
    return q


def init_params(key, input_dim, hidden_dim, action_dim):
    """PyTorch nn.Linear default init: U(-1/sqrt(fan_in), +1/sqrt(fan_in)); weights kept [in, out]."""
    ks = jax.random.split(key, 6)

    def linear(kw, kb, fan_in, fan_out):
        bound = 1.0 / jnp.sqrt(jnp.float32(fan_in))
        w = jax.random.uniform(kw, (fan_in, fan_out), jnp.float32, -bound, bound)
        b = jax.random.uniform(kb, (1, fan_out), jnp.float32, -bound, bound)
        return w, b

    w1, b1 = linear(ks[0], ks[1], input_dim, hidden_dim)
    w2, b2 = linear(ks[2], ks[3], hidden_dim, hidden_dim)
    w3, b3 = linear(ks[4], ks[5], hidden_dim, action_dim)
    return {"w1": w1, "b1": b1, "w2": w2, "b2": b2, "w3": w3, "b3": b3}


if __name__ == "__main__":
    key = jax.random.PRNGKey(0)
    k_x, k_p, k_big = jax.random.split(key, 3)

    # Small shapes consistent with the module (args.mlp_hidden_dim=32).
    batch = 4
    input_dim = 16
    hidden_dim = 32
    action_dim = 8

    params = init_params(k_p, input_dim, hidden_dim, action_dim)
    padded = jax.tree_util.tree_map(jax.block_until_ready,
                                    prepare_params(params))  # hoisted off the hot path

    # Tiny-batch check (single full-array block).
    x = jax.random.normal(k_x, (batch, input_dim), dtype=jnp.float32)
    q = jax.block_until_ready(dqn_forward(x, padded))
    q_ref = dqn_reference(x, params)
    assert q.shape == (batch, action_dim)
    assert jnp.allclose(q, q_ref, atol=1e-2, rtol=1e-2)

    # Replay-sized batch check: 2 parallel grid steps, partial (masked) last block.
    x_big = jax.random.normal(k_big, (300, input_dim), dtype=jnp.float32)
    q_big = jax.block_until_ready(dqn_forward(x_big, padded))
    q_big_ref = dqn_reference(x_big, params)
    assert q_big.shape == (300, action_dim)
    assert jnp.allclose(q_big, q_big_ref, atol=1e-2, rtol=1e-2)
    assert bool(jnp.all(jnp.isfinite(q_big)))

    print("KERNEL_OK")
</pallas_src>

<mosaic_0001>
module attributes {stable_mosaic.version = 11 : i64} {
  func.func @dqn_kernel(%arg0: i32, %arg1: memref<4x16xf32, #tpu.memory_space<vmem>>, %arg2: memref<16x128xbf16, #tpu.memory_space<vmem>>, %arg3: memref<1x128xf32, #tpu.memory_space<vmem>>, %arg4: memref<128x128xbf16, #tpu.memory_space<vmem>>, %arg5: memref<1x128xf32, #tpu.memory_space<vmem>>, %arg6: memref<128x8xbf16, #tpu.memory_space<vmem>>, %arg7: memref<1x8xf32, #tpu.memory_space<vmem>>, %arg8: memref<4x8xf32, #tpu.memory_space<vmem>>) attributes {dimension_semantics = [#tpu.dimension_semantics<parallel>], iteration_bounds = array<i64: 1>, scalar_prefetch = 0 : i64, scratch_operands = 0 : i64, tpu.core_type = #tpu.core_type<tc>, window_params = [{transform_indices = @transform_0, window_bounds = array<i64: 4, 16>}, {pipeline_mode = #tpu.pipeline_mode<synchronous>, transform_indices = @transform_1, window_bounds = array<i64: 16, 128>}, {pipeline_mode = #tpu.pipeline_mode<synchronous>, transform_indices = @transform_2, window_bounds = array<i64: 1, 128>}, {pipeline_mode = #tpu.pipeline_mode<synchronous>, transform_indices = @transform_3, window_bounds = array<i64: 128, 128>}, {pipeline_mode = #tpu.pipeline_mode<synchronous>, transform_indices = @transform_4, window_bounds = array<i64: 1, 128>}, {pipeline_mode = #tpu.pipeline_mode<synchronous>, transform_indices = @transform_5, window_bounds = array<i64: 128, 8>}, {pipeline_mode = #tpu.pipeline_mode<synchronous>, transform_indices = @transform_6, window_bounds = array<i64: 1, 8>}, {transform_indices = @transform_7, window_bounds = array<i64: 4, 8>}]} {
    %c0 = arith.constant 0 : index
    %c0_0 = arith.constant 0 : index
    %0 = vector.load %arg1[%c0, %c0_0] : memref<4x16xf32, #tpu.memory_space<vmem>>, vector<4x16xf32>
    %1 = arith.truncf %0 : vector<4x16xf32> to vector<4x16xbf16>
    %c0_1 = arith.constant 0 : index
    %c0_2 = arith.constant 0 : index
    %2 = vector.load %arg2[%c0_1, %c0_2] : memref<16x128xbf16, #tpu.memory_space<vmem>>, vector<16x128xbf16>
    %cst = arith.constant dense<0.000000e+00> : vector<4x128xf32>
    %3 = tpu.matmul %1, %2, %cst {dimension_numbers = #tpu.dot_dimension_numbers<[1], [0], [0], [1], [0, 0, 1, 1], [], []>} : vector<4x16xbf16>, vector<16x128xbf16>, vector<4x128xf32> -> vector<4x128xf32>
    %c0_3 = arith.constant 0 : index
    %c0_4 = arith.constant 0 : index
    %4 = vector.load %arg3[%c0_3, %c0_4] : memref<1x128xf32, #tpu.memory_space<vmem>>, vector<1x128xf32>
    %5 = vector.broadcast %4 : vector<1x128xf32> to vector<4x128xf32>
    %6 = arith.addf %3, %5 : vector<4x128xf32>
    %cst_5 = arith.constant 0.000000e+00 : f32
    %7 = vector.broadcast %cst_5 : f32 to vector<4x128xf32>
    %8 = arith.maximumf %6, %7 : vector<4x128xf32>
    %9 = arith.truncf %8 : vector<4x128xf32> to vector<4x128xbf16>
    %c0_6 = arith.constant 0 : index
    %c0_7 = arith.constant 0 : index
    %10 = vector.load %arg4[%c0_6, %c0_7] : memref<128x128xbf16, #tpu.memory_space<vmem>>, vector<128x128xbf16>
    %cst_8 = arith.constant dense<0.000000e+00> : vector<4x128xf32>
    %11 = tpu.matmul %9, %10, %cst_8 {dimension_numbers = #tpu.dot_dimension_numbers<[1], [0], [0], [1], [0, 0, 1, 1], [], []>} : vector<4x128xbf16>, vector<128x128xbf16>, vector<4x128xf32> -> vector<4x128xf32>
    %c0_9 = arith.constant 0 : index
    %c0_10 = arith.constant 0 : index
    %12 = vector.load %arg5[%c0_9, %c0_10] : memref<1x128xf32, #tpu.memory_space<vmem>>, vector<1x128xf32>
    %13 = vector.broadcast %12 : vector<1x128xf32> to vector<4x128xf32>
    %14 = arith.addf %11, %13 : vector<4x128xf32>
    %cst_11 = arith.constant 0.000000e+00 : f32
    %15 = vector.broadcast %cst_11 : f32 to vector<4x128xf32>
    %16 = arith.maximumf %14, %15 : vector<4x128xf32>
    %17 = arith.truncf %16 : vector<4x128xf32> to vector<4x128xbf16>
    %c0_12 = arith.constant 0 : index
    %c0_13 = arith.constant 0 : index
    %18 = vector.load %arg6[%c0_12, %c0_13] : memref<128x8xbf16, #tpu.memory_space<vmem>>, vector<128x8xbf16>
    %cst_14 = arith.constant dense<0.000000e+00> : vector<4x8xf32>
    %19 = tpu.matmul %17, %18, %cst_14 {dimension_numbers = #tpu.dot_dimension_numbers<[1], [0], [0], [1], [0, 0, 1, 1], [], []>} : vector<4x128xbf16>, vector<128x8xbf16>, vector<4x8xf32> -> vector<4x8xf32>
    %c0_15 = arith.constant 0 : index
    %c0_16 = arith.constant 0 : index
    %20 = vector.load %arg7[%c0_15, %c0_16] : memref<1x8xf32, #tpu.memory_space<vmem>>, vector<1x8xf32>
    %21 = vector.broadcast %20 : vector<1x8xf32> to vector<4x8xf32>
    %22 = arith.addf %19, %21 : vector<4x8xf32>
    %c0_17 = arith.constant 0 : index
    %c0_18 = arith.constant 0 : index
    %23 = vector.load %arg8[%c0_17, %c0_18] : memref<4x8xf32, #tpu.memory_space<vmem>>, vector<4x8xf32>
    tpu.vector_store %arg8[%c0_17, %c0_18], %22 {strides = array<i32>} : memref<4x8xf32, #tpu.memory_space<vmem>>, vector<4x8xf32>,
    return
  }
  func.func @transform_0(%arg0: i32) -> (i32, i32) {
    %c0_i32 = arith.constant 0 : i32
    %c0_i32_0 = arith.constant 0 : i32
    return %arg0, %c0_i32 : i32, i32
  }
  func.func @transform_1(%arg0: i32) -> (i32, i32) {
    %c0_i32 = arith.constant 0 : i32
    %c0_i32_0 = arith.constant 0 : i32
    %c0_i32_1 = arith.constant 0 : i32
    return %c0_i32, %c0_i32_0 : i32, i32
  }
  func.func @transform_2(%arg0: i32) -> (i32, i32) {
    %c0_i32 = arith.constant 0 : i32
    %c0_i32_0 = arith.constant 0 : i32
    %c0_i32_1 = arith.constant 0 : i32
    return %c0_i32, %c0_i32_0 : i32, i32
  }
  func.func @transform_3(%arg0: i32) -> (i32, i32) {
    %c0_i32 = arith.constant 0 : i32
    %c0_i32_0 = arith.constant 0 : i32
    %c0_i32_1 = arith.constant 0 : i32
    return %c0_i32, %c0_i32_0 : i32, i32
  }
  func.func @transform_4(%arg0: i32) -> (i32, i32) {
    %c0_i32 = arith.constant 0 : i32
    %c0_i32_0 = arith.constant 0 : i32
    %c0_i32_1 = arith.constant 0 : i32
    return %c0_i32, %c0_i32_0 : i32, i32
  }
  func.func @transform_5(%arg0: i32) -> (i32, i32) {
    %c0_i32 = arith.constant 0 : i32
    %c0_i32_0 = arith.constant 0 : i32
    %c0_i32_1 = arith.constant 0 : i32
    return %c0_i32, %c0_i32_0 : i32, i32
  }
  func.func @transform_6(%arg0: i32) -> (i32, i32) {
    %c0_i32 = arith.constant 0 : i32
    %c0_i32_0 = arith.constant 0 : i32
    %c0_i32_1 = arith.constant 0 : i32
    return %c0_i32, %c0_i32_0 : i32, i32
  }
  func.func @transform_7(%arg0: i32) -> (i32, i32) {
    %c0_i32 = arith.constant 0 : i32
    %c0_i32_0 = arith.constant 0 : i32
    return %arg0, %c0_i32 : i32, i32
  }
}

</mosaic_0001>

<llo_original>
// kernel: dqn_forward.1
$region0: #{dqn_forward.1}
  #allocation0 [shape = 'u32[]', space=smem, size = 0x4, offset = 0x4, fixed_abs, tag = 'smem constant byte address 0x4 - core index']
  #allocation1 [shape = 'u32[144,128]{1,0:T(1,128)}', space=vmem, size = 0x12000, scoped, tag = 'internal scratch']
  %s0 = inlined_call_operand.vmem [shape: f32[4,16], index: 0, kind: input, shape index: {}]
  %s1 = inlined_call_operand.vmem [shape: bf16[16,128], index: 1, kind: input, shape index: {}]
  %s2 = inlined_call_operand.vmem [shape: f32[1,128], index: 2, kind: input, shape index: {}]
  %s3 = inlined_call_operand.vmem [shape: bf16[128,128], index: 3, kind: input, shape index: {}]
  %s4 = inlined_call_operand.vmem [shape: f32[1,128], index: 4, kind: input, shape index: {}]
  %s5 = inlined_call_operand.vmem [shape: bf16[128,8], index: 5, kind: input, shape index: {}]
  %s6 = inlined_call_operand.vmem [shape: f32[1,8], index: 6, kind: input, shape index: {}]
  %s7 = inlined_call_operand.hbm [shape: f32[4,8], index: 7, kind: output, shape index: {}]
  %s8 = sld [smem:[#allocation0]]
  $region38: #{dqn_forward.1} parent=0
    _
  %s10 = ssub.s32 1, %s8
  %s11 = scalar_select 0, %s10, %s8
  $region1: #{dqn_forward.1} parent=0
    #allocation2 [shape = 'u8[2048]{0}', space=vmem, size = 0x800, scoped, tag = 'output window, operand 0, single buffered']
    #allocation3 [shape = 's32[1]{0}', space=sflag, size = 0x4, scoped, tag = 'scoped memory for dqn_forward.1']
    %12 = vsyncpa [#allocation3], 0
    // Predicated region
    $region2: #{dqn_forward.1} parent=1 // pred_check
      _
    $region3: #{dqn_forward.1} parent=1 // pred_check_branch
      %14 = sbr.rel (0) target = $region5
    $region4: #{dqn_forward.1} parent=1 // pred_region
      _
    $region5: #{dqn_forward.1} parent=1 // pred_fallthru
      _
    // Predicated region
    $region6: #{dqn_forward.1} parent=1 // pred_check
      _
    $region7: #{dqn_forward.1} parent=1 // pred_check_branch
      %16 = sbr.rel (0) target = $region9
    $region8: #{dqn_forward.1} parent=1 // pred_region
      _
    $region9: #{dqn_forward.1} parent=1 // pred_fallthru
      _
    // Predicated region
    $region10: #{dqn_forward.1} parent=1 // pred_check
      _
    $region11: #{dqn_forward.1} parent=1 // pred_check_branch
      %18 = sbr.rel (0) target = $region13
    $region12: #{dqn_forward.1} parent=1 // pred_region
      _
    $region13: #{dqn_forward.1} parent=1 // pred_fallthru
      _
    // Predicated region
    $region14: #{dqn_forward.1} parent=1 // pred_check
      _
    $region15: #{dqn_forward.1} parent=1 // pred_check_branch
      %20 = sbr.rel (0) target = $region17
    $region16: #{dqn_forward.1} parent=1 // pred_region
      _
    $region17: #{dqn_forward.1} parent=1 // pred_fallthru
      _
    // Predicated region
    $region18: #{dqn_forward.1} parent=1 // pred_check
      _
    $region19: #{dqn_forward.1} parent=1 // pred_check_branch
      %22 = sbr.rel (0) target = $region21
    $region20: #{dqn_forward.1} parent=1 // pred_region
      _
    $region21: #{dqn_forward.1} parent=1 // pred_fallthru
      _
    // Predicated region
    $region22: #{dqn_forward.1} parent=1 // pred_check
      _
    $region23: #{dqn_forward.1} parent=1 // pred_check_branch
      %24 = sbr.rel (0) target = $region25
    $region24: #{dqn_forward.1} parent=1 // pred_region
      _
    $region25: #{dqn_forward.1} parent=1 // pred_fallthru
      _
    // Predicated region
    $region26: #{dqn_forward.1} parent=1 // pred_check
      _
    $region27: #{dqn_forward.1} parent=1 // pred_check_branch
      %26 = sbr.rel (0) target = $region29
    $region28: #{dqn_forward.1} parent=1 // pred_region
      _
    $region29: #{dqn_forward.1} parent=1 // pred_fallthru
      _
    %v28 = vld [vmem:[%s0] sm:$0xf]
    %v29 = vpack.c.bf16 %v28, %v28
    %v30 = vld [vmem:[%s1] sm:$0xf]
    %v31 = vld [vmem:[%s1 + $0x4] sm:$0xf]
    %v32 = vld [vmem:[%s2] sm:$0x1]
    %v34 = vlaneseq
    %v35 = vshrl.u32 %v34, 7
    %v36 = vsub.s32 0, %v35
    %v37 = vrot.slane %v32, %v36
    %v41 = vunpack.c.l.b16 %v30
    %v42 = vunpack.c.l.b16 %v31
    %v43 = vpack.c.b16 %v42, %v41
    %vm45 = vcmask 130048
    %v47 = vsel %vm45, %v29, 0
    %49 = vmatprep.subr.bf16.mxu0 0
    %50 = vmatpush1.bf16.msra.mxu0 %v43
    %51 = vmatprep.subr.bf16.mxu0 0
    %52 = vmatpush1.bf16.msra.mxu0 0
    %53 = vmatprep.subr.bf16.mxu0 0
    %54 = vmatpush1.bf16.msra.mxu0 0
    %55 = vmatprep.subr.bf16.mxu0 0
    %56 = vmatpush1.bf16.msra.mxu0 0
    %57 = vmatprep.subr.bf16.mxu0 0
    %58 = vmatpush1.bf16.msra.mxu0 0
    %59 = vmatprep.subr.bf16.mxu0 0
    %60 = vmatpush1.bf16.msra.mxu0 0
    %61 = vmatprep.subr.bf16.mxu0 0
    %62 = vmatpush1.bf16.msra.mxu0 0
    %63 = vmatprep.subr.bf16.mxu0 0
    %64 = vmatpush1.bf16.msra.mxu0 0
    %65 = vmatprep.subr.bf16.mxu0 0
    %66 = vmatpush1.bf16.msra.mxu0 0
    %67 = vmatprep.subr.bf16.mxu0 0
    %68 = vmatpush1.bf16.msra.mxu0 0
    %69 = vmatprep.subr.bf16.mxu0 0
    %70 = vmatpush1.bf16.msra.mxu0 0
    %71 = vmatprep.subr.bf16.mxu0 0
    %72 = vmatpush1.bf16.msra.mxu0 0
    %73 = vmatprep.subr.bf16.mxu0 0
    %74 = vmatpush1.bf16.msra.mxu0 0
    %75 = vmatprep.subr.bf16.mxu0 0
    %76 = vmatpush1.bf16.msra.mxu0 0
    %77 = vmatprep.subr.bf16.mxu0 0
    %78 = vmatpush1.bf16.msra.mxu0 0
    %79 = vmatprep.subr.bf16.mxu0 0
    %80 = vmatpush1.bf16.msra.mxu0 0
    %81 = vmatprep.mubr.bf16.mxu0 0
    %82 = vmatmul.mubr.bf16.gmra.mrb[0].mxu0 %v47
    %v83 = vpop.f32.mrb[0].mxu0
    %v84 = vadd.f32 %v37, %v83
    %v85 = vpop.f32.mrb[0].mxu0
    %v86 = vpop.f32.mrb[0].mxu0
    %v87 = vpop.f32.mrb[0].mxu0
    %88 = vdwg.mxu0
    %v89 = vmax.f32 %v84, 0.0
    %v90 = vpack.c.bf16 %v89, %v89
    %v91 = vld [vmem:[%s3] sm:$0xf]
    %v92 = vld [vmem:[%s3 + $0x4] sm:$0xf]
    %v93 = vld [vmem:[%s3 + $0x8] sm:$0xf]
    %v94 = vld [vmem:[%s3 + $0xc] sm:$0xf]
    %v95 = vld [vmem:[%s3 + $0x10] sm:$0xf]
    %v96 = vld [vmem:[%s3 + $0x14] sm:$0xf]
    %v97 = vld [vmem:[%s3 + $0x18] sm:$0xf]
    %v98 = vld [vmem:[%s3 + $0x1c] sm:$0xf]
    %v99 = vld [vmem:[%s3 + $0x20] sm:$0xf]
    %v100 = vld [vmem:[%s3 + $0x24] sm:$0xf]
    %v101 = vld [vmem:[%s3 + $0x28] sm:$0xf]
    %v102 = vld [vmem:[%s3 + $0x2c] sm:$0xf]
    %v103 = vld [vmem:[%s3 + $0x30] sm:$0xf]
    %v104 = vld [vmem:[%s3 + $0x34] sm:$0xf]
    %v105 = vld [vmem:[%s3 + $0x38] sm:$0xf]
    %v106 = vld [vmem:[%s3 + $0x3c] sm:$0xf]
    %v107 = vld [vmem:[%s4] sm:$0x1]
    %v109 = vlaneseq
    %v110 = vshrl.u32 %v109, 7
    %v111 = vsub.s32 0, %v110
    %v112 = vrot.slane %v107, %v111
    %v130 = vunpack.c.l.b16 %v91
    %v131 = vunpack.c.l.b16 %v92
    %v132 = vunpack.c.l.b16 %v93
    %v133 = vunpack.c.l.b16 %v94
    %v134 = vunpack.c.l.b16 %v95
    %v135 = vunpack.c.l.b16 %v96
    %v136 = vunpack.c.l.b16 %v97
    %v137 = vunpack.c.l.b16 %v98
    %v138 = vunpack.c.l.b16 %v99
    %v139 = vunpack.c.l.b16 %v100
    %v140 = vunpack.c.l.b16 %v101
    %v141 = vunpack.c.l.b16 %v102
    %v142 = vunpack.c.l.b16 %v103
    %v143 = vunpack.c.l.b16 %v104
    %v144 = vunpack.c.l.b16 %v105
    %v145 = vunpack.c.l.b16 %v106
    %v146 = vpack.c.b16 %v131, %v130
    %v147 = vpack.c.b16 %v133, %v132
    %v148 = vpack.c.b16 %v135, %v134
    %v149 = vpack.c.b16 %v137, %v136
    %v150 = vpack.c.b16 %v139, %v138
    %v151 = vpack.c.b16 %v141, %v140
    %v152 = vpack.c.b16 %v143, %v142
    %v153 = vpack.c.b16 %v145, %v144
    %162 = vmatprep.subr.bf16.mxu0 0
    %163 = vmatpush1.bf16.msra.mxu0 %v146
    %164 = vmatprep.subr.bf16.mxu0 0
    %165 = vmatpush1.bf16.msra.mxu0 %v147
    %166 = vmatprep.subr.bf16.mxu0 0
    %167 = vmatpush1.bf16.msra.mxu0 %v148
    %168 = vmatprep.subr.bf16.mxu0 0
    %169 = vmatpush1.bf16.msra.mxu0 %v149
    %170 = vmatprep.subr.bf16.mxu0 0
    %171 = vmatpush1.bf16.msra.mxu0 %v150
    %172 = vmatprep.subr.bf16.mxu0 0
    %173 = vmatpush1.bf16.msra.mxu0 %v151
    %174 = vmatprep.subr.bf16.mxu0 0
    %175 = vmatpush1.bf16.msra.mxu0 %v152
    %176 = vmatprep.subr.bf16.mxu0 0
    %177 = vmatpush1.bf16.msra.mxu0 %v153
    %178 = vmatprep.subr.bf16.mxu0 0
    %179 = vmatpush1.bf16.msra.mxu0 0
    %180 = vmatprep.subr.bf16.mxu0 0
    %181 = vmatpush1.bf16.msra.mxu0 0
    %182 = vmatprep.subr.bf16.mxu0 0
    %183 = vmatpush1.bf16.msra.mxu0 0
    %184 = vmatprep.subr.bf16.mxu0 0
    %185 = vmatpush1.bf16.msra.mxu0 0
    %186 = vmatprep.subr.bf16.mxu0 0
    %187 = vmatpush1.bf16.msra.mxu0 0
    %188 = vmatprep.subr.bf16.mxu0 0
    %189 = vmatpush1.bf16.msra.mxu0 0
    %190 = vmatprep.subr.bf16.mxu0 0
    %191 = vmatpush1.bf16.msra.mxu0 0
    %192 = vmatprep.subr.bf16.mxu0 0
    %193 = vmatpush1.bf16.msra.mxu0 0
    %194 = vmatprep.mubr.bf16.mxu0 0
    %195 = vmatmul.mubr.bf16.gmra.mrb[0].mxu0 %v90
    %v196 = vpop.f32.mrb[0].mxu0
    %v197 = vadd.f32 %v112, %v196
    %v198 = vpop.f32.mrb[0].mxu0
    %v199 = vpop.f32.mrb[0].mxu0
    %v200 = vpop.f32.mrb[0].mxu0
    %201 = vdwg.mxu0
    %v202 = vmax.f32 %v197, 0.0
    %v203 = vpack.c.bf16 %v202, %v202
    %v204 = vld [vmem:[%s5] sm:$0xf]
    %v205 = vld [vmem:[%s5 + $0x4] sm:$0xf]
    %v206 = vld [vmem:[%s5 + $0x8] sm:$0xf]
    %v207 = vld [vmem:[%s5 + $0xc] sm:$0xf]
    %v208 = vld [vmem:[%s5 + $0x10] sm:$0xf]
    %v209 = vld [vmem:[%s5 + $0x14] sm:$0xf]
    %v210 = vld [vmem:[%s5 + $0x18] sm:$0xf]
    %v211 = vld [vmem:[%s5 + $0x1c] sm:$0xf]
    %v212 = vld [vmem:[%s5 + $0x20] sm:$0xf]
    %v213 = vld [vmem:[%s5 + $0x24] sm:$0xf]
    %v214 = vld [vmem:[%s5 + $0x28] sm:$0xf]
    %v215 = vld [vmem:[%s5 + $0x2c] sm:$0xf]
    %v216 = vld [vmem:[%s5 + $0x30] sm:$0xf]
    %v217 = vld [vmem:[%s5 + $0x34] sm:$0xf]
    %v218 = vld [vmem:[%s5 + $0x38] sm:$0xf]
    %v219 = vld [vmem:[%s5 + $0x3c] sm:$0xf]
    %v220 = vld [vmem:[%s6] sm:$0x1]
    %v222 = vlaneseq
    %v223 = vshrl.u32 %v222, 7
    %v224 = vsub.s32 0, %v223
    %v225 = vrot.slane %v220, %v224
    %v243 = vunpack.c.l.b16 %v204
    %v244 = vunpack.c.l.b16 %v205
    %v245 = vunpack.c.l.b16 %v206
    %v246 = vunpack.c.l.b16 %v207
    %v247 = vunpack.c.l.b16 %v208
    %v248 = vunpack.c.l.b16 %v209
    %v249 = vunpack.c.l.b16 %v210
    %v250 = vunpack.c.l.b16 %v211
    %v251 = vunpack.c.l.b16 %v212
    %v252 = vunpack.c.l.b16 %v213
    %v253 = vunpack.c.l.b16 %v214
    %v254 = vunpack.c.l.b16 %v215
    %v255 = vunpack.c.l.b16 %v216
    %v256 = vunpack.c.l.b16 %v217
    %v257 = vunpack.c.l.b16 %v218
    %v258 = vunpack.c.l.b16 %v219
    %v259 = vpack.c.b16 %v244, %v243
    %v260 = vpack.c.b16 %v246, %v245
    %v261 = vpack.c.b16 %v248, %v247
    %v262 = vpack.c.b16 %v250, %v249
    %v263 = vpack.c.b16 %v252, %v251
    %v264 = vpack.c.b16 %v254, %v253
    %v265 = vpack.c.b16 %v256, %v255
    %v266 = vpack.c.b16 %v258, %v257
    %275 = vmatprep.subr.bf16.mxu0 0
    %276 = vmatpush1.bf16.msra.mxu0 %v259
    %277 = vmatprep.subr.bf16.mxu0 0
    %278 = vmatpush1.bf16.msra.mxu0 %v260
    %279 = vmatprep.subr.bf16.mxu0 0
    %280 = vmatpush1.bf16.msra.mxu0 %v261
    %281 = vmatprep.subr.bf16.mxu0 0
    %282 = vmatpush1.bf16.msra.mxu0 %v262
    %283 = vmatprep.subr.bf16.mxu0 0
    %284 = vmatpush1.bf16.msra.mxu0 %v263
    %285 = vmatprep.subr.bf16.mxu0 0
    %286 = vmatpush1.bf16.msra.mxu0 %v264
    %287 = vmatprep.subr.bf16.mxu0 0
    %288 = vmatpush1.bf16.msra.mxu0 %v265
    %289 = vmatprep.subr.bf16.mxu0 0
    %290 = vmatpush1.bf16.msra.mxu0 %v266
    %291 = vmatprep.subr.bf16.mxu0 0
    %292 = vmatpush1.bf16.msra.mxu0 0
    %293 = vmatprep.subr.bf16.mxu0 0
    %294 = vmatpush1.bf16.msra.mxu0 0
    %295 = vmatprep.subr.bf16.mxu0 0
    %296 = vmatpush1.bf16.msra.mxu0 0
    %297 = vmatprep.subr.bf16.mxu0 0
    %298 = vmatpush1.bf16.msra.mxu0 0
    %299 = vmatprep.subr.bf16.mxu0 0
    %300 = vmatpush1.bf16.msra.mxu0 0
    %301 = vmatprep.subr.bf16.mxu0 0
    %302 = vmatpush1.bf16.msra.mxu0 0
    %303 = vmatprep.subr.bf16.mxu0 0
    %304 = vmatpush1.bf16.msra.mxu0 0
    %305 = vmatprep.subr.bf16.mxu0 0
    %306 = vmatpush1.bf16.msra.mxu0 0
    %307 = vmatprep.mubr.bf16.mxu0 0
    %308 = vmatmul.mubr.bf16.gmra.mrb[0].mxu0 %v203
    %v309 = vpop.f32.mrb[0].mxu0
    %v310 = vadd.f32 %v225, %v309
    %v311 = vpop.f32.mrb[0].mxu0
    %v312 = vpop.f32.mrb[0].mxu0
    %v313 = vpop.f32.mrb[0].mxu0
    %314 = vdwg.mxu0
    %vm315 = vcmask 60416
    %316 = vst.msk [vmem:[#allocation2] sm:$0xf] %vm315, %v310
    // Predicated region
    $region30: #{dqn_forward.1} parent=1 // pred_check
      _
    $region31: #{dqn_forward.1} parent=1 // pred_check_branch
      %318 = sbr.rel (0) target = $region33
    $region32: #{dqn_forward.1} parent=1 // pred_region
      %s320 = ssub.s32 64, 64
      %321 = vsyncadd [#allocation3], %s320
      %s323 = sshll.u32 [#allocation2], 4
      %s324 = int_to_ptr.vmem [resolvable:$true] %s323
      %326 = dma.vmem_to_hbm [thread:$0]  %s324, 64, %s7, [#allocation3]
    $region33: #{dqn_forward.1} parent=1 // pred_fallthru
      _
    // Predicated region
    $region34: #{dqn_forward.1} parent=1 // pred_check
      _
    $region35: #{dqn_forward.1} parent=1 // pred_check_branch
      %328 = sbr.rel (0) target = $region37
    $region36: #{dqn_forward.1} parent=1 // pred_region
      %329 = dma.done [#allocation3], 64
    $region37: #{dqn_forward.1} parent=1 // pred_fallthru
      _
    %330 = vsyncpa [#allocation3], 1

</llo_original>
